<compile_context>
chip_gen: v7x
topology: tpu7x:2x2x1
jax: 0.10.0
libtpu: 0.0.40
codegen_flags: <defaults>
</compile_context>

<pallas_src>
import functools

import jax
import jax.numpy as jnp
from jax import lax
from jax.experimental import pallas as pl
from jax.experimental.pallas import tpu as pltpu

EMBEDDING_DIM = 64
HIDDEN_DIM = 128


def _round_up(x, m):
    return ((x + m - 1) // m) * m


# ----------------------------------------------------------------------------
# Kernel 1: the recurrence.  Runs once (no grid).  Input projection is hoisted
# out of the loop (one big matmul + combined bias); the T-step recurrence is
# fully unrolled so the LLO scheduler can interleave MXU / EUP / VPU work of
# adjacent steps.  batch is padded to 8 so every slice is (8,128)-aligned.
# ----------------------------------------------------------------------------
def rnn_kernel(
    emb_ref,    # (T*Bp, E) bf16, embedded tokens, time-major rows [t*Bp + b]
    wih_ref,    # (E, H)    bf16, input->hidden weight (transposed vs. PyTorch)
    whh_ref,    # (H, H)    bf16, hidden->hidden weight (transposed)
    b_ref,      # (1, H)    f32,  b_ih + b_hh
    h_out_ref,  # (Bp, H)   f32,  last hidden state
    *,
    seq_len,
    batch,
):
    hidden = whh_ref.shape[1]

    # Hoisted input projection: one MXU matmul + bias for all timesteps.
    x_proj = (
        jnp.dot(emb_ref[...], wih_ref[...], preferred_element_type=jnp.float32)
        + b_ref[...]
    )  # (T*Bp, H) f32

    h = jnp.zeros((batch, hidden), jnp.float32)
    # Fully unrolled recurrence (seq_len small & static): one MXU push + one
    # EUP tanh per step on the critical path.  h stays f32; only the MXU
    # operand is cast to bf16.
    for t in range(seq_len):
        pre = x_proj[t * batch:(t + 1) * batch, :] + jnp.dot(
            h.astype(jnp.bfloat16),
            whh_ref[...],
            preferred_element_type=jnp.float32,
        )
        h = jnp.tanh(pre)

    h_out_ref[...] = h


# ----------------------------------------------------------------------------
# Kernel 2: vocab-tiled final linear on the last hidden state.  The vocab grid
# axis is "parallel" (independent tiles) so v7x can shard it across both
# TensorCores; W_fc tiles stream from HBM double-buffered.
# ----------------------------------------------------------------------------
def fc_kernel(
    h_ref,     # (Bp, H)  bf16, last hidden state (grid-invariant, resident)
    wfc_ref,   # (H, TV)  bf16, fc weight tile (transposed)
    bfc_ref,   # (1, TV)  f32,  fc bias tile
    out_ref,   # (Bp, TV) f32,  logits tile
):
    out_ref[...] = (
        jnp.dot(h_ref[...], wfc_ref[...], preferred_element_type=jnp.float32)
        + bfc_ref[...]
    ).astype(out_ref.dtype)


def simple_lm_forward(tokens, params, *, block_v=1024):
    """tokens: (B, T) int32 token ids -> (B, vocab) float32 logits."""
    B, T = tokens.shape
    E, H = EMBEDDING_DIM, HIDDEN_DIM
    V = params["w_fc"].shape[0]

    # ---- glue in plain JAX: embedding gather (data-dependent) + layout prep.
    Bp = max(8, _round_up(B, 8))                      # sublane-aligned batch
    emb = params["emb_table"][tokens]                 # (B, T, E)
    emb_tb = jnp.transpose(emb, (1, 0, 2))            # (T, B, E) time-major
    if Bp != B:
        emb_tb = jnp.pad(emb_tb, ((0, 0), (0, Bp - B), (0, 0)))
    emb_tb = emb_tb.reshape(T * Bp, E).astype(jnp.bfloat16)

    # bf16 operands, f32 accumulation: bf16-native MXU on v6e/v7x.
    wih_t = params["w_ih"].T.astype(jnp.bfloat16)     # (E, H)
    whh_t = params["w_hh"].T.astype(jnp.bfloat16)     # (H, H)
    b = (params["b_ih"] + params["b_hh"]).reshape(1, H).astype(jnp.float32)

    # ---- call 1: recurrence (single invocation, everything fits in VMEM).
    h_last = pl.pallas_call(
        functools.partial(rnn_kernel, seq_len=T, batch=Bp),
        out_shape=jax.ShapeDtypeStruct((Bp, H), jnp.float32),
    )(emb_tb, wih_t, whh_t, b)

    # ---- call 2: vocab-tiled fc.  Pad V up to a lane-dense multiple of the
    # tile (never fall back to one huge un-pipelined tile); slice afterwards.
    block_v = _round_up(block_v, 128)
    tv = min(block_v, _round_up(V, 128))
    Vp = _round_up(V, tv)

    wfc_t = params["w_fc"].T.astype(jnp.bfloat16)     # (H, V)
    bfc = params["b_fc"].reshape(1, V).astype(jnp.float32)
    if Vp != V:
        wfc_t = jnp.pad(wfc_t, ((0, 0), (0, Vp - V)))
        bfc = jnp.pad(bfc, ((0, 0), (0, Vp - V)))

    h_bf16 = h_last.astype(jnp.bfloat16)

    logits_p = pl.pallas_call(
        fc_kernel,
        out_shape=jax.ShapeDtypeStruct((Bp, Vp), jnp.float32),
        grid=(Vp // tv,),
        in_specs=[
            # grid-invariant: constant index map -> DMA'd once, stays resident
            pl.BlockSpec((Bp, H), lambda j: (0, 0)),
            pl.BlockSpec((H, tv), lambda j: (0, j)),   # streamed fc weight tile
            pl.BlockSpec((1, tv), lambda j: (0, j)),   # fc bias tile
        ],
        out_specs=pl.BlockSpec((Bp, tv), lambda j: (0, j)),
        compiler_params=pltpu.CompilerParams(
            # Independent vocab tiles -> shard across TensorCores on v7x.
            dimension_semantics=("parallel",),
            # Explicit scoped-VMEM budget: safe on v5e (16 MiB default raised),
            # v6e and v7x (64 MiB physical) for tv up to several thousand.
            vmem_limit_bytes=32 * 1024 * 1024,
        ),
    )(h_bf16, wfc_t, bfc)

    return logits_p[:B, :V]


def simple_lm_reference(tokens, params):
    """Pure-JAX f32 reference matching PyTorch nn.Embedding -> nn.RNN -> nn.Linear."""
    emb = params["emb_table"][tokens]  # (B, T, E)
    B, T, _ = emb.shape
    H = HIDDEN_DIM

    def step(h, x_t):
        h_new = jnp.tanh(
            x_t @ params["w_ih"].T + params["b_ih"]
            + h @ params["w_hh"].T + params["b_hh"]
        )
        return h_new, None

    h_last, _ = lax.scan(step, jnp.zeros((B, H), jnp.float32),
                         jnp.transpose(emb, (1, 0, 2)))
    return h_last @ params["w_fc"].T + params["b_fc"]


def init_params(vocab_size, key):
    """Deterministic synthetic parameters with the shapes from SimpleLM.__init__."""
    keys = jax.random.split(key, 7)
    E, H = EMBEDDING_DIM, HIDDEN_DIM
    s = 1.0 / jnp.sqrt(H)
    return {
        "emb_table": jax.random.normal(keys[0], (vocab_size, E), jnp.float32),
        "w_ih": jax.random.uniform(keys[1], (H, E), jnp.float32, -s, s),
        "w_hh": jax.random.uniform(keys[2], (H, H), jnp.float32, -s, s),
        "b_ih": jax.random.uniform(keys[3], (H,), jnp.float32, -s, s),
        "b_hh": jax.random.uniform(keys[4], (H,), jnp.float32, -s, s),
        "w_fc": jax.random.uniform(keys[5], (vocab_size, H), jnp.float32, -s, s),
        "b_fc": jax.random.uniform(keys[6], (vocab_size,), jnp.float32, -s, s),
    }


if __name__ == "__main__":
    vocab_size = 256
    batch, seq = 2, 8

    key = jax.random.PRNGKey(0)
    pkey, tkey = jax.random.split(key)
    params = init_params(vocab_size, pkey)
    tokens = jax.random.randint(tkey, (batch, seq), 0, vocab_size, dtype=jnp.int32)

    logits = simple_lm_forward(tokens, params)
    logits = jax.block_until_ready(logits)

    ref = simple_lm_reference(tokens, params)
    # Looser tolerance than pure-f32: bf16 weights / activations with f32
    # accumulation (bf16-native MXU on v6e/v7x).
    if not jnp.allclose(logits, ref, atol=5e-2, rtol=5e-2):
        raise AssertionError("Pallas kernel output does not match reference")

    print("KERNEL_OK")
</pallas_src>

<mosaic_0001>
module attributes {stable_mosaic.version = 11 : i64} {
  func.func @rnn_kernel(%arg0: memref<64x64xbf16, #tpu.memory_space<vmem>>, %arg1: memref<64x128xbf16, #tpu.memory_space<vmem>>, %arg2: memref<128x128xbf16, #tpu.memory_space<vmem>>, %arg3: memref<1x128xf32, #tpu.memory_space<vmem>>, %arg4: memref<8x128xf32, #tpu.memory_space<vmem>>) attributes {dimension_semantics = [], scalar_prefetch = 0 : i64, scratch_operands = 0 : i64, tpu.core_type = #tpu.core_type<tc>} {
    %c0 = arith.constant 0 : index
    %c0_0 = arith.constant 0 : index
    %0 = vector.load %arg0[%c0, %c0_0] : memref<64x64xbf16, #tpu.memory_space<vmem>>, vector<64x64xbf16>
    %c0_1 = arith.constant 0 : index
    %c0_2 = arith.constant 0 : index
    %1 = vector.load %arg1[%c0_1, %c0_2] : memref<64x128xbf16, #tpu.memory_space<vmem>>, vector<64x128xbf16>
    %cst = arith.constant dense<0.000000e+00> : vector<64x128xf32>
    %2 = tpu.matmul %0, %1, %cst {dimension_numbers = #tpu.dot_dimension_numbers<[1], [0], [0], [1], [0, 0, 1, 1], [], []>} : vector<64x64xbf16>, vector<64x128xbf16>, vector<64x128xf32> -> vector<64x128xf32>
    %c0_3 = arith.constant 0 : index
    %c0_4 = arith.constant 0 : index
    %3 = vector.load %arg3[%c0_3, %c0_4] : memref<1x128xf32, #tpu.memory_space<vmem>>, vector<1x128xf32>
    %4 = vector.broadcast %3 : vector<1x128xf32> to vector<64x128xf32>
    %5 = arith.addf %2, %4 : vector<64x128xf32>
    %cst_5 = arith.constant 0.000000e+00 : f32
    %6 = vector.broadcast %cst_5 : f32 to vector<8x128xf32>
    %7 = vector.extract_strided_slice %5 {offsets = [0, 0], sizes = [8, 128], strides = [1, 1]} : vector<64x128xf32> to vector<8x128xf32>
    %8 = arith.truncf %6 : vector<8x128xf32> to vector<8x128xbf16>
    %c0_6 = arith.constant 0 : index
    %c0_7 = arith.constant 0 : index
    %9 = vector.load %arg2[%c0_6, %c0_7] : memref<128x128xbf16, #tpu.memory_space<vmem>>, vector<128x128xbf16>
    %cst_8 = arith.constant dense<0.000000e+00> : vector<8x128xf32>
    %10 = tpu.matmul %8, %9, %cst_8 {dimension_numbers = #tpu.dot_dimension_numbers<[1], [0], [0], [1], [0, 0, 1, 1], [], []>} : vector<8x128xbf16>, vector<128x128xbf16>, vector<8x128xf32> -> vector<8x128xf32>
    %11 = arith.addf %7, %10 : vector<8x128xf32>
    %12 = math.tanh %11 : vector<8x128xf32>
    %13 = vector.extract_strided_slice %5 {offsets = [8, 0], sizes = [8, 128], strides = [1, 1]} : vector<64x128xf32> to vector<8x128xf32>
    %14 = arith.truncf %12 : vector<8x128xf32> to vector<8x128xbf16>
    %c0_9 = arith.constant 0 : index
    %c0_10 = arith.constant 0 : index
    %15 = vector.load %arg2[%c0_9, %c0_10] : memref<128x128xbf16, #tpu.memory_space<vmem>>, vector<128x128xbf16>
    %cst_11 = arith.constant dense<0.000000e+00> : vector<8x128xf32>
    %16 = tpu.matmul %14, %15, %cst_11 {dimension_numbers = #tpu.dot_dimension_numbers<[1], [0], [0], [1], [0, 0, 1, 1], [], []>} : vector<8x128xbf16>, vector<128x128xbf16>, vector<8x128xf32> -> vector<8x128xf32>
    %17 = arith.addf %13, %16 : vector<8x128xf32>
    %18 = math.tanh %17 : vector<8x128xf32>
    %19 = vector.extract_strided_slice %5 {offsets = [16, 0], sizes = [8, 128], strides = [1, 1]} : vector<64x128xf32> to vector<8x128xf32>
    %20 = arith.truncf %18 : vector<8x128xf32> to vector<8x128xbf16>
    %c0_12 = arith.constant 0 : index
    %c0_13 = arith.constant 0 : index
    %21 = vector.load %arg2[%c0_12, %c0_13] : memref<128x128xbf16, #tpu.memory_space<vmem>>, vector<128x128xbf16>
    %cst_14 = arith.constant dense<0.000000e+00> : vector<8x128xf32>
    %22 = tpu.matmul %20, %21, %cst_14 {dimension_numbers = #tpu.dot_dimension_numbers<[1], [0], [0], [1], [0, 0, 1, 1], [], []>} : vector<8x128xbf16>, vector<128x128xbf16>, vector<8x128xf32> -> vector<8x128xf32>
    %23 = arith.addf %19, %22 : vector<8x128xf32>
    %24 = math.tanh %23 : vector<8x128xf32>
    %25 = vector.extract_strided_slice %5 {offsets = [24, 0], sizes = [8, 128], strides = [1, 1]} : vector<64x128xf32> to vector<8x128xf32>
    %26 = arith.truncf %24 : vector<8x128xf32> to vector<8x128xbf16>
    %c0_15 = arith.constant 0 : index
    %c0_16 = arith.constant 0 : index
    %27 = vector.load %arg2[%c0_15, %c0_16] : memref<128x128xbf16, #tpu.memory_space<vmem>>, vector<128x128xbf16>
    %cst_17 = arith.constant dense<0.000000e+00> : vector<8x128xf32>
    %28 = tpu.matmul %26, %27, %cst_17 {dimension_numbers = #tpu.dot_dimension_numbers<[1], [0], [0], [1], [0, 0, 1, 1], [], []>} : vector<8x128xbf16>, vector<128x128xbf16>, vector<8x128xf32> -> vector<8x128xf32>
    %29 = arith.addf %25, %28 : vector<8x128xf32>
    %30 = math.tanh %29 : vector<8x128xf32>
    %31 = vector.extract_strided_slice %5 {offsets = [32, 0], sizes = [8, 128], strides = [1, 1]} : vector<64x128xf32> to vector<8x128xf32>
    %32 = arith.truncf %30 : vector<8x128xf32> to vector<8x128xbf16>
    %c0_18 = arith.constant 0 : index
    %c0_19 = arith.constant 0 : index
    %33 = vector.load %arg2[%c0_18, %c0_19] : memref<128x128xbf16, #tpu.memory_space<vmem>>, vector<128x128xbf16>
    %cst_20 = arith.constant dense<0.000000e+00> : vector<8x128xf32>
    %34 = tpu.matmul %32, %33, %cst_20 {dimension_numbers = #tpu.dot_dimension_numbers<[1], [0], [0], [1], [0, 0, 1, 1], [], []>} : vector<8x128xbf16>, vector<128x128xbf16>, vector<8x128xf32> -> vector<8x128xf32>
    %35 = arith.addf %31, %34 : vector<8x128xf32>
    %36 = math.tanh %35 : vector<8x128xf32>
    %37 = vector.extract_strided_slice %5 {offsets = [40, 0], sizes = [8, 128], strides = [1, 1]} : vector<64x128xf32> to vector<8x128xf32>
    %38 = arith.truncf %36 : vector<8x128xf32> to vector<8x128xbf16>
    %c0_21 = arith.constant 0 : index
    %c0_22 = arith.constant 0 : index
    %39 = vector.load %arg2[%c0_21, %c0_22] : memref<128x128xbf16, #tpu.memory_space<vmem>>, vector<128x128xbf16>
    %cst_23 = arith.constant dense<0.000000e+00> : vector<8x128xf32>
    %40 = tpu.matmul %38, %39, %cst_23 {dimension_numbers = #tpu.dot_dimension_numbers<[1], [0], [0], [1], [0, 0, 1, 1], [], []>} : vector<8x128xbf16>, vector<128x128xbf16>, vector<8x128xf32> -> vector<8x128xf32>
    %41 = arith.addf %37, %40 : vector<8x128xf32>
    %42 = math.tanh %41 : vector<8x128xf32>
    %43 = vector.extract_strided_slice %5 {offsets = [48, 0], sizes = [8, 128], strides = [1, 1]} : vector<64x128xf32> to vector<8x128xf32>
    %44 = arith.truncf %42 : vector<8x128xf32> to vector<8x128xbf16>
    %c0_24 = arith.constant 0 : index
    %c0_25 = arith.constant 0 : index
    %45 = vector.load %arg2[%c0_24, %c0_25] : memref<128x128xbf16, #tpu.memory_space<vmem>>, vector<128x128xbf16>
    %cst_26 = arith.constant dense<0.000000e+00> : vector<8x128xf32>
    %46 = tpu.matmul %44, %45, %cst_26 {dimension_numbers = #tpu.dot_dimension_numbers<[1], [0], [0], [1], [0, 0, 1, 1], [], []>} : vector<8x128xbf16>, vector<128x128xbf16>, vector<8x128xf32> -> vector<8x128xf32>
    %47 = arith.addf %43, %46 : vector<8x128xf32>
    %48 = math.tanh %47 : vector<8x128xf32>
    %49 = vector.extract_strided_slice %5 {offsets = [56, 0], sizes = [8, 128], strides = [1, 1]} : vector<64x128xf32> to vector<8x128xf32>
    %50 = arith.truncf %48 : vector<8x128xf32> to vector<8x128xbf16>
    %c0_27 = arith.constant 0 : index
    %c0_28 = arith.constant 0 : index
    %51 = vector.load %arg2[%c0_27, %c0_28] : memref<128x128xbf16, #tpu.memory_space<vmem>>, vector<128x128xbf16>
    %cst_29 = arith.constant dense<0.000000e+00> : vector<8x128xf32>
    %52 = tpu.matmul %50, %51, %cst_29 {dimension_numbers = #tpu.dot_dimension_numbers<[1], [0], [0], [1], [0, 0, 1, 1], [], []>} : vector<8x128xbf16>, vector<128x128xbf16>, vector<8x128xf32> -> vector<8x128xf32>
    %53 = arith.addf %49, %52 : vector<8x128xf32>
    %54 = math.tanh %53 : vector<8x128xf32>
    %c0_30 = arith.constant 0 : index
    %c0_31 = arith.constant 0 : index
    %55 = vector.load %arg4[%c0_30, %c0_31] : memref<8x128xf32, #tpu.memory_space<vmem>>, vector<8x128xf32>
    tpu.vector_store %arg4[%c0_30, %c0_31], %54 {strides = array<i32>} : memref<8x128xf32, #tpu.memory_space<vmem>>, vector<8x128xf32>,
    return
  }
}

</mosaic_0001>

<llo_original>
// kernel: tpu_custom_call.1
$region0: #{tpu_custom_call.1}
  #allocation0 [shape = 'u32[]', space=smem, size = 0x4, offset = 0x4, fixed_abs, tag = 'smem constant byte address 0x4 - core index']
  #allocation1 [shape = 'u32[144,128]{1,0:T(1,128)}', space=vmem, size = 0x12000, scoped, tag = 'internal scratch']
  %s0 = inlined_call_operand.hbm [shape: bf16[64,64], index: 0, kind: input, shape index: {}]
  %s1 = inlined_call_operand.hbm [shape: bf16[64,128], index: 1, kind: input, shape index: {}]
  %s2 = inlined_call_operand.hbm [shape: bf16[128,128], index: 2, kind: input, shape index: {}]
  %s3 = inlined_call_operand.vmem [shape: f32[1,128], index: 3, kind: input, shape index: {}]
  %s4 = inlined_call_operand.hbm [shape: f32[8,128], index: 4, kind: output, shape index: {}]
  %s5 = sld [smem:[#allocation0]]
  $region38: #{tpu_custom_call.1} parent=0
    _
  %s7 = ssub.s32 1, %s5
  %s8 = scalar_select 0, %s7, %s5
  $region1: #{tpu_custom_call.1} parent=0
    #allocation2 [shape = 'u8[16384]{0}', space=vmem, size = 0x4000, scoped, tag = 'input window, operand 0, single buffered']
    #allocation3 [shape = 's32[1]{0}', space=sflag, size = 0x4, scoped, tag = 'scoped memory for tpu_custom_call.1']
    #allocation4 [shape = 's32[1]{0}', space=sflag, size = 0x4, scoped, tag = 'scoped memory for tpu_custom_call.1']
    #allocation5 [shape = 'u8[16384]{0}', space=vmem, size = 0x4000, scoped, tag = 'input window, operand 1, single buffered']
    #allocation6 [shape = 's32[1]{0}', space=sflag, size = 0x4, scoped, tag = 'scoped memory for tpu_custom_call.1']
    #allocation7 [shape = 'u8[32768]{0}', space=vmem, size = 0x8000, scoped, tag = 'input window, operand 2, single buffered']
    #allocation8 [shape = 'u8[4096]{0}', space=vmem, size = 0x1000, scoped, tag = 'output window, operand 0, single buffered']
    %9 = vsyncpa [#allocation3], 0
    %10 = vsyncpa [#allocation6], 0
    %11 = vsyncpa [#allocation4], 0
    // Predicated region
    $region2: #{tpu_custom_call.1} parent=1 // pred_check
      _
    $region3: #{tpu_custom_call.1} parent=1 // pred_check_branch
      %13 = sbr.rel (0) target = $region5
    $region4: #{tpu_custom_call.1} parent=1 // pred_region
      %s15 = ssub.s32 512, 512
      %16 = vsyncadd [#allocation3], %s15
      %s17 = sshll.u32 [#allocation2], 4
      %s18 = int_to_ptr.vmem [resolvable:$true] %s17
      %23 = dma.hbm_to_vmem [thread:$0]  %s0, 512, %s18, [#allocation3], 64, 64, 4
    $region5: #{tpu_custom_call.1} parent=1 // pred_fallthru
      _
    // Predicated region
    $region6: #{tpu_custom_call.1} parent=1 // pred_check
      _
    $region7: #{tpu_custom_call.1} parent=1 // pred_check_branch
      %25 = sbr.rel (0) target = $region9
    $region8: #{tpu_custom_call.1} parent=1 // pred_region
      %s27 = ssub.s32 512, 512
      %28 = vsyncadd [#allocation6], %s27
      %s29 = sshll.u32 [#allocation5], 4
      %s30 = int_to_ptr.vmem [resolvable:$true] %s29
      %35 = dma.hbm_to_vmem [thread:$0]  %s1, 512, %s30, [#allocation6], 64, 64, 4
    $region9: #{tpu_custom_call.1} parent=1 // pred_fallthru
      _
    // Predicated region
    $region10: #{tpu_custom_call.1} parent=1 // pred_check
      _
    $region11: #{tpu_custom_call.1} parent=1 // pred_check_branch
      %37 = sbr.rel (0) target = $region13
    $region12: #{tpu_custom_call.1} parent=1 // pred_region
      %s39 = ssub.s32 1024, 1024
      %40 = vsyncadd [#allocation6], %s39
      %s41 = sshll.u32 [#allocation7], 4
      %s42 = int_to_ptr.vmem [resolvable:$true] %s41
      %47 = dma.hbm_to_vmem [thread:$0]  %s2, 1024, %s42, [#allocation6], 64, 64, 4
    $region13: #{tpu_custom_call.1} parent=1 // pred_fallthru
      _
    // Predicated region
    $region14: #{tpu_custom_call.1} parent=1 // pred_check
      _
    $region15: #{tpu_custom_call.1} parent=1 // pred_check_branch
      %49 = sbr.rel (0) target = $region17
    $region16: #{tpu_custom_call.1} parent=1 // pred_region
      _
    $region17: #{tpu_custom_call.1} parent=1 // pred_fallthru
      _
    // Predicated region
    $region18: #{tpu_custom_call.1} parent=1 // pred_check
      _
    $region19: #{tpu_custom_call.1} parent=1 // pred_check_branch
      %51 = sbr.rel (0) target = $region21
    $region20: #{tpu_custom_call.1} parent=1 // pred_region
      %52 = dma.done [#allocation3], 512
    $region21: #{tpu_custom_call.1} parent=1 // pred_fallthru
      _
    // Predicated region
    $region22: #{tpu_custom_call.1} parent=1 // pred_check
      _
    $region23: #{tpu_custom_call.1} parent=1 // pred_check_branch
      %54 = sbr.rel (0) target = $region25
    $region24: #{tpu_custom_call.1} parent=1 // pred_region
      %55 = dma.done [#allocation6], 512
    $region25: #{tpu_custom_call.1} parent=1 // pred_fallthru
      _
    // Predicated region
    $region26: #{tpu_custom_call.1} parent=1 // pred_check
      _
    $region27: #{tpu_custom_call.1} parent=1 // pred_check_branch
      %57 = sbr.rel (0) target = $region29
    $region28: #{tpu_custom_call.1} parent=1 // pred_region
      %58 = dma.done [#allocation6], 1024
    $region29: #{tpu_custom_call.1} parent=1 // pred_fallthru
      _
    %v60 = vld [vmem:[#allocation2] sm:$0xf]
    %v61 = vld [vmem:[#allocation2 + $0x4] sm:$0xf]
    %v62 = vld [vmem:[#allocation2 + $0x8] sm:$0xf]
    %v63 = vld [vmem:[#allocation2 + $0xc] sm:$0xf]
    %v64 = vld [vmem:[#allocation2 + $0x10] sm:$0xf]
    %v65 = vld [vmem:[#allocation2 + $0x14] sm:$0xf]
    %v66 = vld [vmem:[#allocation2 + $0x18] sm:$0xf]
    %v67 = vld [vmem:[#allocation2 + $0x1c] sm:$0xf]
    %v68 = vld [vmem:[#allocation5] sm:$0xf]
    %v69 = vld [vmem:[#allocation5 + $0x4] sm:$0xf]
    %v70 = vld [vmem:[#allocation5 + $0x8] sm:$0xf]
    %v71 = vld [vmem:[#allocation5 + $0xc] sm:$0xf]
    %v72 = vld [vmem:[#allocation5 + $0x10] sm:$0xf]
    %v73 = vld [vmem:[#allocation5 + $0x14] sm:$0xf]
    %v74 = vld [vmem:[#allocation5 + $0x18] sm:$0xf]
    %v75 = vld [vmem:[#allocation5 + $0x1c] sm:$0xf]
    %v76 = vld [vmem:[%s3] sm:$0x1]
    %v78 = vlaneseq
    %v79 = vshrl.u32 %v78, 7
    %v80 = vsub.s32 0, %v79
    %v81 = vrot.slane %v76, %v80
    %v91 = vunpack.c.l.b16 %v60
    %v92 = vunpack.c.l.b16 %v61
    %v93 = vunpack.c.l.b16 %v62
    %v94 = vunpack.c.l.b16 %v63
    %v95 = vunpack.c.l.b16 %v64
    %v96 = vunpack.c.l.b16 %v65
    %v97 = vunpack.c.l.b16 %v66
    %v98 = vunpack.c.l.b16 %v67
    %v99 = vpack.c.b16 %v92, %v91
    %v100 = vpack.c.b16 %v94, %v93
    %v101 = vpack.c.b16 %v96, %v95
    %v102 = vpack.c.b16 %v98, %v97
    %v111 = vunpack.c.l.b16 %v68
    %v112 = vunpack.c.l.b16 %v69
    %v113 = vunpack.c.l.b16 %v70
    %v114 = vunpack.c.l.b16 %v71
    %v115 = vunpack.c.l.b16 %v72
    %v116 = vunpack.c.l.b16 %v73
    %v117 = vunpack.c.l.b16 %v74
    %v118 = vunpack.c.l.b16 %v75
    %v119 = vpack.c.b16 %v112, %v111
    %v120 = vpack.c.b16 %v114, %v113
    %v121 = vpack.c.b16 %v116, %v115
    %v122 = vpack.c.b16 %v118, %v117
    %vm127 = vcmask 523264
    %v129 = vsel %vm127, %v99, 0
    %v132 = vsel %vm127, %v100, 0
    %v135 = vsel %vm127, %v101, 0
    %v138 = vsel %vm127, %v102, 0
    %140 = vmatprep.subr.bf16.mxu0 0
    %141 = vmatpush1.bf16.msra.mxu0 %v119
    %142 = vmatprep.subr.bf16.mxu0 0
    %143 = vmatpush1.bf16.msra.mxu0 %v120
    %144 = vmatprep.subr.bf16.mxu0 0
    %145 = vmatpush1.bf16.msra.mxu0 %v121
    %146 = vmatprep.subr.bf16.mxu0 0
    %147 = vmatpush1.bf16.msra.mxu0 %v122
    %148 = vmatprep.subr.bf16.mxu0 0
    %149 = vmatpush1.bf16.msra.mxu0 0
    %150 = vmatprep.subr.bf16.mxu0 0
    %151 = vmatpush1.bf16.msra.mxu0 0
    %152 = vmatprep.subr.bf16.mxu0 0
    %153 = vmatpush1.bf16.msra.mxu0 0
    %154 = vmatprep.subr.bf16.mxu0 0
    %155 = vmatpush1.bf16.msra.mxu0 0
    %156 = vmatprep.subr.bf16.mxu0 0
    %157 = vmatpush1.bf16.msra.mxu0 0
    %158 = vmatprep.subr.bf16.mxu0 0
    %159 = vmatpush1.bf16.msra.mxu0 0
    %160 = vmatprep.subr.bf16.mxu0 0
    %161 = vmatpush1.bf16.msra.mxu0 0
    %162 = vmatprep.subr.bf16.mxu0 0
    %163 = vmatpush1.bf16.msra.mxu0 0
    %164 = vmatprep.subr.bf16.mxu0 0
    %165 = vmatpush1.bf16.msra.mxu0 0
    %166 = vmatprep.subr.bf16.mxu0 0
    %167 = vmatpush1.bf16.msra.mxu0 0
    %168 = vmatprep.subr.bf16.mxu0 0
    %169 = vmatpush1.bf16.msra.mxu0 0
    %170 = vmatprep.subr.bf16.mxu0 0
    %171 = vmatpush1.bf16.msra.mxu0 0
    %172 = vmatprep.mubr.bf16.mxu0 0
    %173 = vmatmul.mubr.bf16.gmra.mrb[0].mxu0 %v129
    %v174 = vpop.f32.mrb[0].mxu0
    %v175 = vadd.f32 %v81, %v174
    %v176 = vpop.f32.mrb[0].mxu0
    %v177 = vpop.f32.mrb[0].mxu0
    %v178 = vadd.f32 %v81, %v177
    %v179 = vpop.f32.mrb[0].mxu0
    %180 = vmatprep.mubr.bf16.mxu0 0
    %181 = vmatmul.mubr.bf16.gmra.mrb[0].mxu0 %v132
    %v182 = vpop.f32.mrb[0].mxu0
    %v183 = vadd.f32 %v81, %v182
    %v184 = vpop.f32.mrb[0].mxu0
    %v185 = vpop.f32.mrb[0].mxu0
    %v186 = vadd.f32 %v81, %v185
    %v187 = vpop.f32.mrb[0].mxu0
    %188 = vmatprep.mubr.bf16.mxu0 0
    %189 = vmatmul.mubr.bf16.gmra.mrb[0].mxu0 %v135
    %v190 = vpop.f32.mrb[0].mxu0
    %v191 = vadd.f32 %v81, %v190
    %v192 = vpop.f32.mrb[0].mxu0
    %v193 = vpop.f32.mrb[0].mxu0
    %v194 = vadd.f32 %v81, %v193
    %v195 = vpop.f32.mrb[0].mxu0
    %196 = vmatprep.mubr.bf16.mxu0 0
    %197 = vmatmul.mubr.bf16.gmra.mrb[0].mxu0 %v138
    %v198 = vpop.f32.mrb[0].mxu0
    %v199 = vadd.f32 %v81, %v198
    %v200 = vpop.f32.mrb[0].mxu0
    %v201 = vpop.f32.mrb[0].mxu0
    %v202 = vadd.f32 %v81, %v201
    %v203 = vpop.f32.mrb[0].mxu0
    %204 = vdwg.mxu0
    %v205 = vld [vmem:[#allocation7] sm:$0xf]
    %v206 = vld [vmem:[#allocation7 + $0x4] sm:$0xf]
    %v207 = vld [vmem:[#allocation7 + $0x8] sm:$0xf]
    %v208 = vld [vmem:[#allocation7 + $0xc] sm:$0xf]
    %v209 = vld [vmem:[#allocation7 + $0x10] sm:$0xf]
    %v210 = vld [vmem:[#allocation7 + $0x14] sm:$0xf]
    %v211 = vld [vmem:[#allocation7 + $0x18] sm:$0xf]
    %v212 = vld [vmem:[#allocation7 + $0x1c] sm:$0xf]
    %v213 = vld [vmem:[#allocation7 + $0x20] sm:$0xf]
    %v214 = vld [vmem:[#allocation7 + $0x24] sm:$0xf]
    %v215 = vld [vmem:[#allocation7 + $0x28] sm:$0xf]
    %v216 = vld [vmem:[#allocation7 + $0x2c] sm:$0xf]
    %v217 = vld [vmem:[#allocation7 + $0x30] sm:$0xf]
    %v218 = vld [vmem:[#allocation7 + $0x34] sm:$0xf]
    %v219 = vld [vmem:[#allocation7 + $0x38] sm:$0xf]
    %v220 = vld [vmem:[#allocation7 + $0x3c] sm:$0xf]
    %v237 = vunpack.c.l.b16 %v205
    %v238 = vunpack.c.l.b16 %v206
    %v239 = vunpack.c.l.b16 %v207
    %v240 = vunpack.c.l.b16 %v208
    %v241 = vunpack.c.l.b16 %v209
    %v242 = vunpack.c.l.b16 %v210
    %v243 = vunpack.c.l.b16 %v211
    %v244 = vunpack.c.l.b16 %v212
    %v245 = vunpack.c.l.b16 %v213
    %v246 = vunpack.c.l.b16 %v214
    %v247 = vunpack.c.l.b16 %v215
    %v248 = vunpack.c.l.b16 %v216
    %v249 = vunpack.c.l.b16 %v217
    %v250 = vunpack.c.l.b16 %v218
    %v251 = vunpack.c.l.b16 %v219
    %v252 = vunpack.c.l.b16 %v220
    %v253 = vpack.c.b16 %v238, %v237
    %v254 = vpack.c.b16 %v240, %v239
    %v255 = vpack.c.b16 %v242, %v241
    %v256 = vpack.c.b16 %v244, %v243
    %v257 = vpack.c.b16 %v246, %v245
    %v258 = vpack.c.b16 %v248, %v247
    %v259 = vpack.c.b16 %v250, %v249
    %v260 = vpack.c.b16 %v252, %v251
    %269 = vmatprep.subr.bf16.mxu0 0
    %270 = vmatpush1.bf16.msra.mxu0 %v253
    %271 = vmatprep.subr.bf16.mxu0 0
    %272 = vmatpush1.bf16.msra.mxu0 %v254
    %273 = vmatprep.subr.bf16.mxu0 0
    %274 = vmatpush1.bf16.msra.mxu0 %v255
    %275 = vmatprep.subr.bf16.mxu0 0
    %276 = vmatpush1.bf16.msra.mxu0 %v256
    %277 = vmatprep.subr.bf16.mxu0 0
    %278 = vmatpush1.bf16.msra.mxu0 %v257
    %279 = vmatprep.subr.bf16.mxu0 0
    %280 = vmatpush1.bf16.msra.mxu0 %v258
    %281 = vmatprep.subr.bf16.mxu0 0
    %282 = vmatpush1.bf16.msra.mxu0 %v259
    %283 = vmatprep.subr.bf16.mxu0 0
    %284 = vmatpush1.bf16.msra.mxu0 %v260
    %285 = vmatprep.subr.bf16.mxu0 0
    %286 = vmatpush1.bf16.msra.mxu0 0
    %287 = vmatprep.subr.bf16.mxu0 0
    %288 = vmatpush1.bf16.msra.mxu0 0
    %289 = vmatprep.subr.bf16.mxu0 0
    %290 = vmatpush1.bf16.msra.mxu0 0
    %291 = vmatprep.subr.bf16.mxu0 0
    %292 = vmatpush1.bf16.msra.mxu0 0
    %293 = vmatprep.subr.bf16.mxu0 0
    %294 = vmatpush1.bf16.msra.mxu0 0
    %295 = vmatprep.subr.bf16.mxu0 0
    %296 = vmatpush1.bf16.msra.mxu0 0
    %297 = vmatprep.subr.bf16.mxu0 0
    %298 = vmatpush1.bf16.msra.mxu0 0
    %299 = vmatprep.subr.bf16.mxu0 0
    %300 = vmatpush1.bf16.msra.mxu0 0
    %301 = vmatprep.mubr.bf16.mxu0 0
    %302 = vmatmul.mubr.bf16.gmra.mrb[0].mxu0 0
    %v303 = vpop.f32.mrb[0].mxu0
    %v304 = vadd.f32 0.0, %v303
    %v305 = vpop.f32.mrb[0].mxu0
    %v306 = vpop.f32.mrb[0].mxu0
    %v307 = vpop.f32.mrb[0].mxu0
    %308 = vdwg.mxu0
    %v309 = vadd.f32 %v175, %v304
    %v310 = vtanh.pop %v309
    %v311 = vpack.c.bf16 %v310, %v310
    %312 = vmatprep.subr.bf16.mxu0 0
    %313 = vmatpush1.bf16.msra.mxu0 %v253
    %314 = vmatprep.subr.bf16.mxu0 0
    %315 = vmatpush1.bf16.msra.mxu0 %v254
    %316 = vmatprep.subr.bf16.mxu0 0
    %317 = vmatpush1.bf16.msra.mxu0 %v255
    %318 = vmatprep.subr.bf16.mxu0 0
    %319 = vmatpush1.bf16.msra.mxu0 %v256
    %320 = vmatprep.subr.bf16.mxu0 0
    %321 = vmatpush1.bf16.msra.mxu0 %v257
    %322 = vmatprep.subr.bf16.mxu0 0
    %323 = vmatpush1.bf16.msra.mxu0 %v258
    %324 = vmatprep.subr.bf16.mxu0 0
    %325 = vmatpush1.bf16.msra.mxu0 %v259
    %326 = vmatprep.subr.bf16.mxu0 0
    %327 = vmatpush1.bf16.msra.mxu0 %v260
    %328 = vmatprep.subr.bf16.mxu0 0
    %329 = vmatpush1.bf16.msra.mxu0 0
    %330 = vmatprep.subr.bf16.mxu0 0
    %331 = vmatpush1.bf16.msra.mxu0 0
    %332 = vmatprep.subr.bf16.mxu0 0
    %333 = vmatpush1.bf16.msra.mxu0 0
    %334 = vmatprep.subr.bf16.mxu0 0
    %335 = vmatpush1.bf16.msra.mxu0 0
    %336 = vmatprep.subr.bf16.mxu0 0
    %337 = vmatpush1.bf16.msra.mxu0 0
    %338 = vmatprep.subr.bf16.mxu0 0
    %339 = vmatpush1.bf16.msra.mxu0 0
    %340 = vmatprep.subr.bf16.mxu0 0
    %341 = vmatpush1.bf16.msra.mxu0 0
    %342 = vmatprep.subr.bf16.mxu0 0
    %343 = vmatpush1.bf16.msra.mxu0 0
    %344 = vmatprep.mubr.bf16.mxu0 0
    %345 = vmatmul.mubr.bf16.gmra.mrb[0].mxu0 %v311
    %v346 = vpop.f32.mrb[0].mxu0
    %v347 = vadd.f32 0.0, %v346
    %v348 = vpop.f32.mrb[0].mxu0
    %v349 = vpop.f32.mrb[0].mxu0
    %v350 = vpop.f32.mrb[0].mxu0
    %351 = vdwg.mxu0
    %v352 = vadd.f32 %v178, %v347
    %v353 = vtanh.pop %v352
    %v354 = vpack.c.bf16 %v353, %v353
    %355 = vmatprep.subr.bf16.mxu0 0
    %356 = vmatpush1.bf16.msra.mxu0 %v253
    %357 = vmatprep.subr.bf16.mxu0 0
    %358 = vmatpush1.bf16.msra.mxu0 %v254
    %359 = vmatprep.subr.bf16.mxu0 0
    %360 = vmatpush1.bf16.msra.mxu0 %v255
    %361 = vmatprep.subr.bf16.mxu0 0
    %362 = vmatpush1.bf16.msra.mxu0 %v256
    %363 = vmatprep.subr.bf16.mxu0 0
    %364 = vmatpush1.bf16.msra.mxu0 %v257
    %365 = vmatprep.subr.bf16.mxu0 0
    %366 = vmatpush1.bf16.msra.mxu0 %v258
    %367 = vmatprep.subr.bf16.mxu0 0
    %368 = vmatpush1.bf16.msra.mxu0 %v259
    %369 = vmatprep.subr.bf16.mxu0 0
    %370 = vmatpush1.bf16.msra.mxu0 %v260
    %371 = vmatprep.subr.bf16.mxu0 0
    %372 = vmatpush1.bf16.msra.mxu0 0
    %373 = vmatprep.subr.bf16.mxu0 0
    %374 = vmatpush1.bf16.msra.mxu0 0
    %375 = vmatprep.subr.bf16.mxu0 0
    %376 = vmatpush1.bf16.msra.mxu0 0
    %377 = vmatprep.subr.bf16.mxu0 0
    %378 = vmatpush1.bf16.msra.mxu0 0
    %379 = vmatprep.subr.bf16.mxu0 0
    %380 = vmatpush1.bf16.msra.mxu0 0
    %381 = vmatprep.subr.bf16.mxu0 0
    %382 = vmatpush1.bf16.msra.mxu0 0
    %383 = vmatprep.subr.bf16.mxu0 0
    %384 = vmatpush1.bf16.msra.mxu0 0
    %385 = vmatprep.subr.bf16.mxu0 0
    %386 = vmatpush1.bf16.msra.mxu0 0
    %387 = vmatprep.mubr.bf16.mxu0 0
    %388 = vmatmul.mubr.bf16.gmra.mrb[0].mxu0 %v354
    %v389 = vpop.f32.mrb[0].mxu0
    %v390 = vadd.f32 0.0, %v389
    %v391 = vpop.f32.mrb[0].mxu0
    %v392 = vpop.f32.mrb[0].mxu0
    %v393 = vpop.f32.mrb[0].mxu0
    %394 = vdwg.mxu0
    %v395 = vadd.f32 %v183, %v390
    %v396 = vtanh.pop %v395
    %v397 = vpack.c.bf16 %v396, %v396
    %398 = vmatprep.subr.bf16.mxu0 0
    %399 = vmatpush1.bf16.msra.mxu0 %v253
    %400 = vmatprep.subr.bf16.mxu0 0
    %401 = vmatpush1.bf16.msra.mxu0 %v254
    %402 = vmatprep.subr.bf16.mxu0 0
    %403 = vmatpush1.bf16.msra.mxu0 %v255
    %404 = vmatprep.subr.bf16.mxu0 0
    %405 = vmatpush1.bf16.msra.mxu0 %v256
    %406 = vmatprep.subr.bf16.mxu0 0
    %407 = vmatpush1.bf16.msra.mxu0 %v257
    %408 = vmatprep.subr.bf16.mxu0 0
    %409 = vmatpush1.bf16.msra.mxu0 %v258
    %410 = vmatprep.subr.bf16.mxu0 0
    %411 = vmatpush1.bf16.msra.mxu0 %v259
    %412 = vmatprep.subr.bf16.mxu0 0
    %413 = vmatpush1.bf16.msra.mxu0 %v260
    %414 = vmatprep.subr.bf16.mxu0 0
    %415 = vmatpush1.bf16.msra.mxu0 0
    %416 = vmatprep.subr.bf16.mxu0 0
    %417 = vmatpush1.bf16.msra.mxu0 0
    %418 = vmatprep.subr.bf16.mxu0 0
    %419 = vmatpush1.bf16.msra.mxu0 0
    %420 = vmatprep.subr.bf16.mxu0 0
    %421 = vmatpush1.bf16.msra.mxu0 0
    %422 = vmatprep.subr.bf16.mxu0 0
    %423 = vmatpush1.bf16.msra.mxu0 0
    %424 = vmatprep.subr.bf16.mxu0 0
    %425 = vmatpush1.bf16.msra.mxu0 0
    %426 = vmatprep.subr.bf16.mxu0 0
    %427 = vmatpush1.bf16.msra.mxu0 0
    %428 = vmatprep.subr.bf16.mxu0 0
    %429 = vmatpush1.bf16.msra.mxu0 0
    %430 = vmatprep.mubr.bf16.mxu0 0
    %431 = vmatmul.mubr.bf16.gmra.mrb[0].mxu0 %v397
    %v432 = vpop.f32.mrb[0].mxu0
    %v433 = vadd.f32 0.0, %v432
    %v434 = vpop.f32.mrb[0].mxu0
    %v435 = vpop.f32.mrb[0].mxu0
    %v436 = vpop.f32.mrb[0].mxu0
    %437 = vdwg.mxu0
    %v438 = vadd.f32 %v186, %v433
    %v439 = vtanh.pop %v438
    %v440 = vpack.c.bf16 %v439, %v439
    %441 = vmatprep.subr.bf16.mxu0 0
    %442 = vmatpush1.bf16.msra.mxu0 %v253
    %443 = vmatprep.subr.bf16.mxu0 0
    %444 = vmatpush1.bf16.msra.mxu0 %v254
    %445 = vmatprep.subr.bf16.mxu0 0
    %446 = vmatpush1.bf16.msra.mxu0 %v255
    %447 = vmatprep.subr.bf16.mxu0 0
    %448 = vmatpush1.bf16.msra.mxu0 %v256
    %449 = vmatprep.subr.bf16.mxu0 0
    %450 = vmatpush1.bf16.msra.mxu0 %v257
    %451 = vmatprep.subr.bf16.mxu0 0
    %452 = vmatpush1.bf16.msra.mxu0 %v258
    %453 = vmatprep.subr.bf16.mxu0 0
    %454 = vmatpush1.bf16.msra.mxu0 %v259
    %455 = vmatprep.subr.bf16.mxu0 0
    %456 = vmatpush1.bf16.msra.mxu0 %v260
    %457 = vmatprep.subr.bf16.mxu0 0
    %458 = vmatpush1.bf16.msra.mxu0 0
    %459 = vmatprep.subr.bf16.mxu0 0
    %460 = vmatpush1.bf16.msra.mxu0 0
    %461 = vmatprep.subr.bf16.mxu0 0
    %462 = vmatpush1.bf16.msra.mxu0 0
    %463 = vmatprep.subr.bf16.mxu0 0
    %464 = vmatpush1.bf16.msra.mxu0 0
    %465 = vmatprep.subr.bf16.mxu0 0
    %466 = vmatpush1.bf16.msra.mxu0 0
    %467 = vmatprep.subr.bf16.mxu0 0
    %468 = vmatpush1.bf16.msra.mxu0 0
    %469 = vmatprep.subr.bf16.mxu0 0
    %470 = vmatpush1.bf16.msra.mxu0 0
    %471 = vmatprep.subr.bf16.mxu0 0
    %472 = vmatpush1.bf16.msra.mxu0 0
    %473 = vmatprep.mubr.bf16.mxu0 0
    %474 = vmatmul.mubr.bf16.gmra.mrb[0].mxu0 %v440
    %v475 = vpop.f32.mrb[0].mxu0
    %v476 = vadd.f32 0.0, %v475
    %v477 = vpop.f32.mrb[0].mxu0
    %v478 = vpop.f32.mrb[0].mxu0
    %v479 = vpop.f32.mrb[0].mxu0
    %480 = vdwg.mxu0
    %v481 = vadd.f32 %v191, %v476
    %v482 = vtanh.pop %v481
    %v483 = vpack.c.bf16 %v482, %v482
    %484 = vmatprep.subr.bf16.mxu0 0
    %485 = vmatpush1.bf16.msra.mxu0 %v253
    %486 = vmatprep.subr.bf16.mxu0 0
    %487 = vmatpush1.bf16.msra.mxu0 %v254
    %488 = vmatprep.subr.bf16.mxu0 0
    %489 = vmatpush1.bf16.msra.mxu0 %v255
    %490 = vmatprep.subr.bf16.mxu0 0
    %491 = vmatpush1.bf16.msra.mxu0 %v256
    %492 = vmatprep.subr.bf16.mxu0 0
    %493 = vmatpush1.bf16.msra.mxu0 %v257
    %494 = vmatprep.subr.bf16.mxu0 0
    %495 = vmatpush1.bf16.msra.mxu0 %v258
    %496 = vmatprep.subr.bf16.mxu0 0
    %497 = vmatpush1.bf16.msra.mxu0 %v259
    %498 = vmatprep.subr.bf16.mxu0 0
    %499 = vmatpush1.bf16.msra.mxu0 %v260
    %500 = vmatprep.subr.bf16.mxu0 0
    %501 = vmatpush1.bf16.msra.mxu0 0
    %502 = vmatprep.subr.bf16.mxu0 0
    %503 = vmatpush1.bf16.msra.mxu0 0
    %504 = vmatprep.subr.bf16.mxu0 0
    %505 = vmatpush1.bf16.msra.mxu0 0
    %506 = vmatprep.subr.bf16.mxu0 0
    %507 = vmatpush1.bf16.msra.mxu0 0
    %508 = vmatprep.subr.bf16.mxu0 0
    %509 = vmatpush1.bf16.msra.mxu0 0
    %510 = vmatprep.subr.bf16.mxu0 0
    %511 = vmatpush1.bf16.msra.mxu0 0
    %512 = vmatprep.subr.bf16.mxu0 0
    %513 = vmatpush1.bf16.msra.mxu0 0
    %514 = vmatprep.subr.bf16.mxu0 0
    %515 = vmatpush1.bf16.msra.mxu0 0
    %516 = vmatprep.mubr.bf16.mxu0 0
    %517 = vmatmul.mubr.bf16.gmra.mrb[0].mxu0 %v483
    %v518 = vpop.f32.mrb[0].mxu0
    %v519 = vadd.f32 0.0, %v518
    %v520 = vpop.f32.mrb[0].mxu0
    %v521 = vpop.f32.mrb[0].mxu0
    %v522 = vpop.f32.mrb[0].mxu0
    %523 = vdwg.mxu0
    %v524 = vadd.f32 %v194, %v519
    %v525 = vtanh.pop %v524
    %v526 = vpack.c.bf16 %v525, %v525
    %527 = vmatprep.subr.bf16.mxu0 0
    %528 = vmatpush1.bf16.msra.mxu0 %v253
    %529 = vmatprep.subr.bf16.mxu0 0
    %530 = vmatpush1.bf16.msra.mxu0 %v254
    %531 = vmatprep.subr.bf16.mxu0 0
    %532 = vmatpush1.bf16.msra.mxu0 %v255
    %533 = vmatprep.subr.bf16.mxu0 0
    %534 = vmatpush1.bf16.msra.mxu0 %v256
    %535 = vmatprep.subr.bf16.mxu0 0
    %536 = vmatpush1.bf16.msra.mxu0 %v257
    %537 = vmatprep.subr.bf16.mxu0 0
    %538 = vmatpush1.bf16.msra.mxu0 %v258
    %539 = vmatprep.subr.bf16.mxu0 0
    %540 = vmatpush1.bf16.msra.mxu0 %v259
    %541 = vmatprep.subr.bf16.mxu0 0
    %542 = vmatpush1.bf16.msra.mxu0 %v260
    %543 = vmatprep.subr.bf16.mxu0 0
    %544 = vmatpush1.bf16.msra.mxu0 0
    %545 = vmatprep.subr.bf16.mxu0 0
    %546 = vmatpush1.bf16.msra.mxu0 0
    %547 = vmatprep.subr.bf16.mxu0 0
    %548 = vmatpush1.bf16.msra.mxu0 0
    %549 = vmatprep.subr.bf16.mxu0 0
    %550 = vmatpush1.bf16.msra.mxu0 0
    %551 = vmatprep.subr.bf16.mxu0 0
    %552 = vmatpush1.bf16.msra.mxu0 0
    %553 = vmatprep.subr.bf16.mxu0 0
    %554 = vmatpush1.bf16.msra.mxu0 0
    %555 = vmatprep.subr.bf16.mxu0 0
    %556 = vmatpush1.bf16.msra.mxu0 0
    %557 = vmatprep.subr.bf16.mxu0 0
    %558 = vmatpush1.bf16.msra.mxu0 0
    %559 = vmatprep.mubr.bf16.mxu0 0
    %560 = vmatmul.mubr.bf16.gmra.mrb[0].mxu0 %v526
    %v561 = vpop.f32.mrb[0].mxu0
    %v562 = vadd.f32 0.0, %v561
    %v563 = vpop.f32.mrb[0].mxu0
    %v564 = vpop.f32.mrb[0].mxu0
    %v565 = vpop.f32.mrb[0].mxu0
    %566 = vdwg.mxu0
    %v567 = vadd.f32 %v199, %v562
    %v568 = vtanh.pop %v567
    %v569 = vpack.c.bf16 %v568, %v568
    %570 = vmatprep.subr.bf16.mxu0 0
    %571 = vmatpush1.bf16.msra.mxu0 %v253
    %572 = vmatprep.subr.bf16.mxu0 0
    %573 = vmatpush1.bf16.msra.mxu0 %v254
    %574 = vmatprep.subr.bf16.mxu0 0
    %575 = vmatpush1.bf16.msra.mxu0 %v255
    %576 = vmatprep.subr.bf16.mxu0 0
    %577 = vmatpush1.bf16.msra.mxu0 %v256
    %578 = vmatprep.subr.bf16.mxu0 0
    %579 = vmatpush1.bf16.msra.mxu0 %v257
    %580 = vmatprep.subr.bf16.mxu0 0
    %581 = vmatpush1.bf16.msra.mxu0 %v258
    %582 = vmatprep.subr.bf16.mxu0 0
    %583 = vmatpush1.bf16.msra.mxu0 %v259
    %584 = vmatprep.subr.bf16.mxu0 0
    %585 = vmatpush1.bf16.msra.mxu0 %v260
    %586 = vmatprep.subr.bf16.mxu0 0
    %587 = vmatpush1.bf16.msra.mxu0 0
    %588 = vmatprep.subr.bf16.mxu0 0
    %589 = vmatpush1.bf16.msra.mxu0 0
    %590 = vmatprep.subr.bf16.mxu0 0
    %591 = vmatpush1.bf16.msra.mxu0 0
    %592 = vmatprep.subr.bf16.mxu0 0
    %593 = vmatpush1.bf16.msra.mxu0 0
    %594 = vmatprep.subr.bf16.mxu0 0
    %595 = vmatpush1.bf16.msra.mxu0 0
    %596 = vmatprep.subr.bf16.mxu0 0
    %597 = vmatpush1.bf16.msra.mxu0 0
    %598 = vmatprep.subr.bf16.mxu0 0
    %599 = vmatpush1.bf16.msra.mxu0 0
    %600 = vmatprep.subr.bf16.mxu0 0
    %601 = vmatpush1.bf16.msra.mxu0 0
    %602 = vmatprep.mubr.bf16.mxu0 0
    %603 = vmatmul.mubr.bf16.gmra.mrb[0].mxu0 %v569
    %v604 = vpop.f32.mrb[0].mxu0
    %v605 = vadd.f32 0.0, %v604
    %v606 = vpop.f32.mrb[0].mxu0
    %v607 = vpop.f32.mrb[0].mxu0
    %v608 = vpop.f32.mrb[0].mxu0
    %609 = vdwg.mxu0
    %v610 = vadd.f32 %v202, %v605
    %v611 = vtanh.pop %v610
    %612 = vst [vmem:[#allocation8] sm:$0xff] %v611
    // Predicated region
    $region30: #{tpu_custom_call.1} parent=1 // pred_check
      _
    $region31: #{tpu_custom_call.1} parent=1 // pred_check_branch
      %614 = sbr.rel (0) target = $region33
    $region32: #{tpu_custom_call.1} parent=1 // pred_region
      %s616 = ssub.s32 128, 128
      %617 = vsyncadd [#allocation4], %s616
      %s619 = sshll.u32 [#allocation8], 4
      %s620 = int_to_ptr.vmem [resolvable:$true] %s619
      %622 = dma.vmem_to_hbm [thread:$0]  %s620, 128, %s4, [#allocation4]
    $region33: #{tpu_custom_call.1} parent=1 // pred_fallthru
      _
    // Predicated region
    $region34: #{tpu_custom_call.1} parent=1 // pred_check
      _
    $region35: #{tpu_custom_call.1} parent=1 // pred_check_branch
      %624 = sbr.rel (0) target = $region37
    $region36: #{tpu_custom_call.1} parent=1 // pred_region
      %625 = dma.done [#allocation4], 128
    $region37: #{tpu_custom_call.1} parent=1 // pred_fallthru
      _
    %626 = vsyncpa [#allocation3], 1
    %627 = vsyncpa [#allocation6], 1
    %628 = vsyncpa [#allocation4], 1

</llo_original>
